<compile_context>
chip_gen: v7x
topology: tpu7x:2x2x1
jax: 0.10.0
libtpu: 0.0.40
codegen_flags: <defaults>
</compile_context>

<pallas_src>
import functools

import jax
import jax.numpy as jnp
import numpy as np
from jax.experimental import pallas as pl
from jax.experimental.pallas import tpu as pltpu

_LANE = 128


def _round_up(x, m):
    return ((x + m - 1) // m) * m


def _pick_bt(b, cap=8):
    # largest divisor of b that is <= cap (batch elements per grid step)
    for d in range(min(b, cap), 0, -1):
        if b % d == 0:
            return d
    return 1


@functools.partial(jax.jit, static_argnames=("nt_cap",))
def hungarian_cost_matrix(cost_weight, pred_labels, pred_masks, pred_bboxes,
                          tgt_onehot, tgt_masks, gt_bboxes, *, nt_cap=2048):
    """Matching-cost matrix C of shape (B, n_q, M).

    cost_weight : (4,)             pred_labels : (B, n_q, n_cls)
    pred_masks  : (B, n_q, N)      pred_bboxes : (B, n_q, >=3)
    tgt_onehot  : (B, M, n_cls)    tgt_masks   : (B, M, N)
    gt_bboxes   : (B, M, >=3)
    """
    f32 = jnp.float32
    B, n_q, n_cls = pred_labels.shape
    N = pred_masks.shape[-1]
    M = tgt_masks.shape[1]

    # ---- tiling ----------------------------------------------------------
    # Lane-dense output: pad the (tiny) instance dim M up to a lane multiple.
    Mp = _round_up(max(M, 1), _LANE)
    # N reduction tiling: lane-aligned tile, capped so the two double-buffered
    # mask streams fit the scoped-VMEM budget on every generation
    # (v5e 16 MiB scoped default, v7x 64 MiB physical).  nt_cap is a static
    # knob -- retune per generation for very large N.
    if N <= nt_cap:
        Nt = _round_up(N, _LANE)
        Np = Nt
    else:
        Nt = nt_cap
        Np = _round_up(N, Nt)
    Bt = _pick_bt(B)                       # batch elements per grid step
    n_k = Np // Nt

    # ---- input prep (padding / transposes / storage dtypes) --------------
    w = cost_weight.astype(f32)
    plabel = pred_labels.astype(f32)
    pbbox = pred_bboxes[..., :3].astype(f32)
    # mask logits: pad N with a large negative so softplus/sigmoid of the
    # padding are exactly 0 (no correction term needed).
    x_pad = jnp.pad(pred_masks.astype(f32), ((0, 0), (0, 0), (0, Np - N)),
                    constant_values=-1.0e4)
    # targets: zero-pad instance dim M -> Mp and point dim N -> Np, transpose.
    tm = jnp.pad(tgt_masks.astype(f32), ((0, 0), (0, Mp - M), (0, Np - N)))
    tmask_t = jnp.transpose(tm, (0, 2, 1)).astype(jnp.bfloat16)   # 0/1 exact
    oh = jnp.pad(tgt_onehot.astype(f32), ((0, 0), (0, Mp - M), (0, 0)))
    onehot_t = jnp.transpose(oh, (0, 2, 1))                       # (B,n_cls,Mp)
    gb = jnp.pad(gt_bboxes[..., :3].astype(f32), ((0, 0), (0, Mp - M), (0, 0)))
    gbbox_t = jnp.transpose(gb, (0, 2, 1))                        # (B,3,Mp)

    inv_n = 1.0 / float(N)

    def kernel(w_ref, plabel_ref, pbbox_ref, gbbox_ref, onehot_ref,
               pmask_ref, tmask_ref, out_ref,
               acc_xt, acc_st, acc_sp, acc_ss, acc_ts):
        k = pl.program_id(1)

        @pl.when(k == 0)
        def _init():
            acc_xt[...] = jnp.zeros_like(acc_xt)
            acc_st[...] = jnp.zeros_like(acc_st)
            acc_sp[...] = jnp.zeros_like(acc_sp)
            acc_ss[...] = jnp.zeros_like(acc_ss)
            acc_ts[...] = jnp.zeros_like(acc_ts)

        xk = pmask_ref[...]                           # (Bt, n_q, Nt) mask logits
        tgt = tmask_ref[...].astype(jnp.float32)      # (Bt, Nt, Mp)

        # One shared transcendental serves softplus AND sigmoid:
        #   t = exp(-|x|); softplus(x) = max(x,0)+log1p(t);
        #   sigmoid(x)  = where(x>=0, 1, t) / (1+t)
        t = jnp.exp(-jnp.abs(xk))
        sp = jnp.maximum(xk, 0.0) + jnp.log1p(t)
        s = jnp.where(xk >= 0.0, 1.0, t) * pl.reciprocal(1.0 + t, approx=True)

        # Single stacked MXU contraction over this N tile: [x ; sigmoid(x)] @ tgt
        lhs = jnp.concatenate([xk, s], axis=1)        # (Bt, 2*n_q, Nt)
        prod = jnp.einsum('bqn,bnm->bqm', lhs, tgt,
                          preferred_element_type=jnp.float32)
        acc_xt[...] += prod[:, :n_q, :]               # x @ tgt
        acc_st[...] += prod[:, n_q:, :]               # sigmoid(x) @ tgt
        acc_sp[...] += jnp.sum(sp, axis=-1, keepdims=True)
        acc_ss[...] += jnp.sum(s, axis=-1, keepdims=True)
        acc_ts[...] += jnp.sum(tgt, axis=1, keepdims=True)

        @pl.when(k == n_k - 1)
        def _finalize():
            logits = plabel_ref[...]                  # (Bt, n_q, n_cls)
            onehot = onehot_ref[...]                  # (Bt, n_cls, Mp)
            pbb = pbbox_ref[...]                      # (Bt, n_q, 3)
            gbb = gbbox_ref[...]                      # (Bt, 3, Mp)

            # cost_class = -softmax(logits)[:, gt_labels]  (gather as matmul;
            # normalization moved after the contraction, recip on the EUP)
            mx = jnp.max(logits, axis=-1, keepdims=True)
            e = jnp.exp(logits - mx)
            esum = jnp.sum(e, axis=-1, keepdims=True)
            edot = jnp.einsum('bqc,bcm->bqm', e, onehot,
                              preferred_element_type=jnp.float32)
            cost_class = -edot * pl.reciprocal(esum, approx=True)

            # batch_sigmoid_bce_loss, algebraically reduced:
            #   softplus(-x)@tgt + softplus(x)@(1-tgt) = sum_N softplus(x) - x@tgt
            cost_mask = (acc_sp[...] - acc_xt[...]) * inv_n

            # batch_dice_loss
            denom = acc_ss[...] + acc_ts[...] + 1.0
            cost_dice = 1.0 - (2.0 * acc_st[...] + 1.0) * pl.reciprocal(
                denom, approx=True)

            # cost_bbox = cdist(pred_bbox, gt_bbox[:, :3], p=1), 3 coords unrolled
            cost_bbox = (jnp.abs(pbb[:, :, 0:1] - gbb[:, 0:1, :]) +
                         jnp.abs(pbb[:, :, 1:2] - gbb[:, 1:2, :]) +
                         jnp.abs(pbb[:, :, 2:3] - gbb[:, 2:3, :]))

            c = (w_ref[0] * cost_class + w_ref[1] * cost_mask +
                 w_ref[2] * cost_dice + w_ref[3] * cost_bbox)
            out_ref[...] = jnp.nan_to_num(c)          # mirrors np.nan_to_num(C)

    grid_spec = pltpu.PrefetchScalarGridSpec(
        num_scalar_prefetch=0,
        grid=(B // Bt, n_k),                                # (batch, N-reduction)
        in_specs=[
            pl.BlockSpec(memory_space=pltpu.MemorySpace.SMEM),        # weights
            pl.BlockSpec((Bt, n_q, n_cls), lambda b, k: (b, 0, 0)),   # labels
            pl.BlockSpec((Bt, n_q, 3),     lambda b, k: (b, 0, 0)),   # pred bbox
            pl.BlockSpec((Bt, 3, Mp),      lambda b, k: (b, 0, 0)),   # gt bbox^T
            pl.BlockSpec((Bt, n_cls, Mp),  lambda b, k: (b, 0, 0)),   # onehot^T
            pl.BlockSpec((Bt, n_q, Nt),    lambda b, k: (b, 0, k)),   # mask logits
            pl.BlockSpec((Bt, Nt, Mp),     lambda b, k: (b, k, 0)),   # gt masks^T
        ],
        out_specs=pl.BlockSpec((Bt, n_q, Mp), lambda b, k: (b, 0, 0)),
        scratch_shapes=[
            pltpu.VMEM((Bt, n_q, Mp), jnp.float32),   # acc: x @ tgt
            pltpu.VMEM((Bt, n_q, Mp), jnp.float32),   # acc: sigmoid(x) @ tgt
            pltpu.VMEM((Bt, n_q, 1), jnp.float32),    # acc: sum_N softplus(x)
            pltpu.VMEM((Bt, n_q, 1), jnp.float32),    # acc: sum_N sigmoid(x)
            pltpu.VMEM((Bt, 1, Mp), jnp.float32),     # acc: sum_N tgt
        ],
    )
    out = pl.pallas_call(
        kernel,
        out_shape=jax.ShapeDtypeStruct((B, n_q, Mp), jnp.float32),
        grid_spec=grid_spec,
        compiler_params=pltpu.CompilerParams(
            dimension_semantics=("parallel", "arbitrary")),
    )(w, plabel, pbbox, gbbox_t, onehot_t, x_pad, tmask_t)
    return out[:, :, :M]


# ---------------- host-side reference & assignment glue ----------------
def _np_softplus(x):
    return np.maximum(x, 0.0) + np.log1p(np.exp(-np.abs(x)))


def _reference_cost(w, plabel, pmask, pbbox, onehot, tmask, gbbox):
    e = np.exp(plabel - plabel.max(-1, keepdims=True))
    p = e / e.sum(-1, keepdims=True)
    cost_class = -(p @ onehot.T)
    pos = _np_softplus(-pmask)
    neg = _np_softplus(pmask)
    cost_mask = (pos @ tmask.T + neg @ (1.0 - tmask).T) / pmask.shape[1]
    s = 1.0 / (1.0 + np.exp(-pmask))
    num = 2.0 * (s @ tmask.T)
    den = s.sum(-1)[:, None] + tmask.sum(-1)[None, :]
    cost_dice = 1.0 - (num + 1.0) / (den + 1.0)
    cost_bbox = np.abs(pbbox[:, None, :] - gbbox[None, :, :]).sum(-1)
    return (w[0] * cost_class + w[1] * cost_mask +
            w[2] * cost_dice + w[3] * cost_bbox)


def _greedy_assignment(cost):
    cost = cost.copy()
    rows, cols = [], []
    for _ in range(min(cost.shape)):
        i, j = np.unravel_index(np.argmin(cost), cost.shape)
        rows.append(i); cols.append(j)
        cost[i, :] = np.inf; cost[:, j] = np.inf
    order = np.argsort(rows)
    return np.asarray(rows)[order], np.asarray(cols)[order]


def _solve_assignments(C):
    # TODO(synk): linear_sum_assignment (Hungarian algorithm) is a sequential
    # combinatorial solve with no Pallas equivalent; run it on the host.
    try:
        from scipy.optimize import linear_sum_assignment
        idx = [linear_sum_assignment(np.nan_to_num(np.array(c))) for c in C]
    except Exception:
        idx = [_greedy_assignment(np.nan_to_num(np.array(c))) for c in C]
    return [(np.asarray(i, np.int64), np.asarray(j, np.int64)) for i, j in idx]


def _run_case(key, B, n_q, n_cls, N, M, nt_cap):
    ks = jax.random.split(key, 6)
    pred_labels = jax.random.normal(ks[0], (B, n_q, n_cls), jnp.float32)
    pred_masks = jax.random.normal(ks[1], (B, n_q, N), jnp.float32)
    pred_bboxes = jax.random.uniform(ks[2], (B, n_q, 3), jnp.float32)
    gt_labels = jax.random.randint(ks[3], (B, M), 0, n_cls)
    gt_spmasks = (jax.random.uniform(ks[4], (B, M, N)) > 0.5).astype(jnp.float32)
    gt_bboxes = jax.random.uniform(ks[5], (B, M, 6), jnp.float32)  # [:, :3] used
    cost_weight = jnp.array([0.5, 1.0, 1.0, 0.5], jnp.float32)     # matcher buffer
    tgt_onehot = jax.nn.one_hot(gt_labels, n_cls, dtype=jnp.float32)

    C = hungarian_cost_matrix(cost_weight, pred_labels, pred_masks, pred_bboxes,
                              tgt_onehot, gt_spmasks, gt_bboxes, nt_cap=nt_cap)
    C = jax.block_until_ready(C)

    # correctness vs a pure-numpy reference of the PyTorch math
    # (tolerance relaxed for the approx EUP reciprocals)
    for b in range(B):
        ref = _reference_cost(np.array(cost_weight), np.array(pred_labels[b]),
                              np.array(pred_masks[b]), np.array(pred_bboxes[b]),
                              np.array(tgt_onehot[b]), np.array(gt_spmasks[b]),
                              np.array(gt_bboxes[b, :, :3]))
        np.testing.assert_allclose(np.array(C[b]), ref, rtol=5e-3, atol=5e-3)
    return C


if __name__ == "__main__":
    key = jax.random.PRNGKey(0)
    k1, k2 = jax.random.split(key)

    # case 1: toy shapes, single N tile
    C1 = _run_case(k1, B=2, n_q=8, n_cls=19, N=128, M=4, nt_cap=2048)
    # case 2: exercises the N-reduction grid axis (3 tiles) and M padding
    C2 = _run_case(k2, B=2, n_q=8, n_cls=19, N=768, M=5, nt_cap=256)

    indices = _solve_assignments(C1)
    assert len(indices) == C1.shape[0]

    print("KERNEL_OK")
</pallas_src>

<mosaic_0001>
module attributes {stable_mosaic.version = 11 : i64} {
  func.func @kernel(%arg0: i32, %arg1: i32, %arg2: memref<4xf32, #tpu.memory_space<smem>>, %arg3: memref<2x8x19xf32, #tpu.memory_space<vmem>>, %arg4: memref<2x8x3xf32, #tpu.memory_space<vmem>>, %arg5: memref<2x3x128xf32, #tpu.memory_space<vmem>>, %arg6: memref<2x19x128xf32, #tpu.memory_space<vmem>>, %arg7: memref<2x8x128xf32, #tpu.memory_space<vmem>>, %arg8: memref<2x128x128xbf16, #tpu.memory_space<vmem>>, %arg9: memref<2x8x128xf32, #tpu.memory_space<vmem>>, %arg10: memref<2x8x128xf32, #tpu.memory_space<vmem>>, %arg11: memref<2x8x128xf32, #tpu.memory_space<vmem>>, %arg12: memref<2x8x1xf32, #tpu.memory_space<vmem>>, %arg13: memref<2x8x1xf32, #tpu.memory_space<vmem>>, %arg14: memref<2x1x128xf32, #tpu.memory_space<vmem>>) attributes {dimension_semantics = [#tpu.dimension_semantics<parallel>, #tpu.dimension_semantics<arbitrary>], iteration_bounds = array<i64: 1, 1>, scalar_prefetch = 0 : i64, scratch_operands = 5 : i64, tpu.core_type = #tpu.core_type<tc>, window_params = [{transform_indices = @transform_0, window_bounds = array<i64: 4>}, {transform_indices = @transform_1, window_bounds = array<i64: 2, 8, 19>}, {transform_indices = @transform_2, window_bounds = array<i64: 2, 8, 3>}, {transform_indices = @transform_3, window_bounds = array<i64: 2, 3, 128>}, {transform_indices = @transform_4, window_bounds = array<i64: 2, 19, 128>}, {transform_indices = @transform_5, window_bounds = array<i64: 2, 8, 128>}, {transform_indices = @transform_6, window_bounds = array<i64: 2, 128, 128>}, {transform_indices = @transform_7, window_bounds = array<i64: 2, 8, 128>}]} {
    %c0_i32 = arith.constant 0 : i32
    %0 = arith.cmpi eq, %arg1, %c0_i32 : i32
    %1 = arith.extui %0 : i1 to i32
    %c0_i32_0 = arith.constant 0 : i32
    %2 = arith.cmpi ne, %1, %c0_i32_0 : i32
    scf.if %2 {
      %cst_46 = arith.constant 0.000000e+00 : f32
      %50 = vector.broadcast %cst_46 : f32 to vector<2x8x128xf32>
      %c0_47 = arith.constant 0 : index
      %c0_48 = arith.constant 0 : index
      %c0_49 = arith.constant 0 : index
      %51 = vector.load %arg10[%c0_47, %c0_48, %c0_49] : memref<2x8x128xf32, #tpu.memory_space<vmem>>, vector<2x8x128xf32>
      tpu.vector_store %arg10[%c0_47, %c0_48, %c0_49], %50 {strides = array<i32>} : memref<2x8x128xf32, #tpu.memory_space<vmem>>, vector<2x8x128xf32>,
      %cst_50 = arith.constant 0.000000e+00 : f32
      %52 = vector.broadcast %cst_50 : f32 to vector<2x8x128xf32>
      %c0_51 = arith.constant 0 : index
      %c0_52 = arith.constant 0 : index
      %c0_53 = arith.constant 0 : index
      %53 = vector.load %arg11[%c0_51, %c0_52, %c0_53] : memref<2x8x128xf32, #tpu.memory_space<vmem>>, vector<2x8x128xf32>
      tpu.vector_store %arg11[%c0_51, %c0_52, %c0_53], %52 {strides = array<i32>} : memref<2x8x128xf32, #tpu.memory_space<vmem>>, vector<2x8x128xf32>,
      %cst_54 = arith.constant 0.000000e+00 : f32
      %54 = vector.broadcast %cst_54 : f32 to vector<2x8x1xf32>
      %c0_55 = arith.constant 0 : index
      %c0_56 = arith.constant 0 : index
      %c0_57 = arith.constant 0 : index
      %55 = vector.load %arg12[%c0_55, %c0_56, %c0_57] : memref<2x8x1xf32, #tpu.memory_space<vmem>>, vector<2x8x1xf32>
      tpu.vector_store %arg12[%c0_55, %c0_56, %c0_57], %54 {strides = array<i32>} : memref<2x8x1xf32, #tpu.memory_space<vmem>>, vector<2x8x1xf32>,
      %cst_58 = arith.constant 0.000000e+00 : f32
      %56 = vector.broadcast %cst_58 : f32 to vector<2x8x1xf32>
      %c0_59 = arith.constant 0 : index
      %c0_60 = arith.constant 0 : index
      %c0_61 = arith.constant 0 : index
      %57 = vector.load %arg13[%c0_59, %c0_60, %c0_61] : memref<2x8x1xf32, #tpu.memory_space<vmem>>, vector<2x8x1xf32>
      tpu.vector_store %arg13[%c0_59, %c0_60, %c0_61], %56 {strides = array<i32>} : memref<2x8x1xf32, #tpu.memory_space<vmem>>, vector<2x8x1xf32>,
      %cst_62 = arith.constant 0.000000e+00 : f32
      %58 = vector.broadcast %cst_62 : f32 to vector<2x1x128xf32>
      %c0_63 = arith.constant 0 : index
      %c0_64 = arith.constant 0 : index
      %c0_65 = arith.constant 0 : index
      %59 = vector.load %arg14[%c0_63, %c0_64, %c0_65] : memref<2x1x128xf32, #tpu.memory_space<vmem>>, vector<2x1x128xf32>
      tpu.vector_store %arg14[%c0_63, %c0_64, %c0_65], %58 {strides = array<i32>} : memref<2x1x128xf32, #tpu.memory_space<vmem>>, vector<2x1x128xf32>,
    } else {
    }
    %c0 = arith.constant 0 : index
    %c0_1 = arith.constant 0 : index
    %c0_2 = arith.constant 0 : index
    %3 = vector.load %arg7[%c0, %c0_1, %c0_2] : memref<2x8x128xf32, #tpu.memory_space<vmem>>, vector<2x8x128xf32>
    %c0_3 = arith.constant 0 : index
    %c0_4 = arith.constant 0 : index
    %c0_5 = arith.constant 0 : index
    %4 = vector.load %arg8[%c0_3, %c0_4, %c0_5] : memref<2x128x128xbf16, #tpu.memory_space<vmem>>, vector<2x128x128xbf16>
    %5 = arith.extf %4 : vector<2x128x128xbf16> to vector<2x128x128xf32>
    %6 = math.absf %3 : vector<2x8x128xf32>
    %cst = arith.constant 0.000000e+00 : f32
    %7 = vector.broadcast %cst : f32 to vector<2x8x128xf32>
    %8 = arith.subf %7, %6 : vector<2x8x128xf32>
    %9 = math.exp %8 : vector<2x8x128xf32>
    %cst_6 = arith.constant 0.000000e+00 : f32
    %10 = vector.broadcast %cst_6 : f32 to vector<2x8x128xf32>
    %11 = arith.maximumf %3, %10 : vector<2x8x128xf32>
    %12 = math.log1p %9 : vector<2x8x128xf32>
    %13 = arith.addf %11, %12 : vector<2x8x128xf32>
    %cst_7 = arith.constant 0.000000e+00 : f32
    %14 = vector.broadcast %cst_7 : f32 to vector<2x8x128xf32>
    %15 = arith.cmpf oge, %3, %14 : vector<2x8x128xf32>
    %cst_8 = arith.constant 1.000000e+00 : f32
    %16 = vector.broadcast %cst_8 : f32 to vector<2x8x128xf32>
    %17 = arith.select %15, %16, %9 : vector<2x8x128xi1>, vector<2x8x128xf32>
    %cst_9 = arith.constant 1.000000e+00 : f32
    %18 = vector.broadcast %cst_9 : f32 to vector<2x8x128xf32>
    %19 = arith.addf %18, %9 : vector<2x8x128xf32>
    %20 = tpu.reciprocal %19 {approx = true} : vector<2x8x128xf32> -> vector<2x8x128xf32>
    %21 = arith.mulf %17, %20 : vector<2x8x128xf32>
    %22 = tpu.concatenate %3, %21 in 1 : vector<2x8x128xf32>, vector<2x8x128xf32> -> vector<2x16x128xf32>
    "tpu.trace_start"() <{level = 10 : i32, message = "bqn,bnm->bqm"}> : () -> ()
    %cst_10 = arith.constant dense<0.000000e+00> : vector<2x16x128xf32>
    %23 = tpu.matmul %22, %5, %cst_10 {dimension_numbers = #tpu.dot_dimension_numbers<[2], [1], [1], [2], [0, 0, 0, 1, 1, 2], [0], [0]>} : vector<2x16x128xf32>, vector<2x128x128xf32>, vector<2x16x128xf32> -> vector<2x16x128xf32>
    "tpu.trace_stop"() : () -> ()
    %c0_11 = arith.constant 0 : index
    %c0_12 = arith.constant 0 : index
    %c0_13 = arith.constant 0 : index
    %24 = vector.load %arg10[%c0_11, %c0_12, %c0_13] : memref<2x8x128xf32, #tpu.memory_space<vmem>>, vector<2x8x128xf32>
    %25 = vector.extract_strided_slice %23 {offsets = [0, 0, 0], sizes = [2, 8, 128], strides = [1, 1, 1]} : vector<2x16x128xf32> to vector<2x8x128xf32>
    %26 = arith.addf %24, %25 : vector<2x8x128xf32>
    %c0_14 = arith.constant 0 : index
    %c0_15 = arith.constant 0 : index
    %c0_16 = arith.constant 0 : index
    %27 = vector.load %arg10[%c0_14, %c0_15, %c0_16] : memref<2x8x128xf32, #tpu.memory_space<vmem>>, vector<2x8x128xf32>
    tpu.vector_store %arg10[%c0_14, %c0_15, %c0_16], %26 {strides = array<i32>} : memref<2x8x128xf32, #tpu.memory_space<vmem>>, vector<2x8x128xf32>,
    %c0_17 = arith.constant 0 : index
    %c0_18 = arith.constant 0 : index
    %c0_19 = arith.constant 0 : index
    %28 = vector.load %arg11[%c0_17, %c0_18, %c0_19] : memref<2x8x128xf32, #tpu.memory_space<vmem>>, vector<2x8x128xf32>
    %29 = vector.extract_strided_slice %23 {offsets = [0, 8, 0], sizes = [2, 8, 128], strides = [1, 1, 1]} : vector<2x16x128xf32> to vector<2x8x128xf32>
    %30 = arith.addf %28, %29 : vector<2x8x128xf32>
    %c0_20 = arith.constant 0 : index
    %c0_21 = arith.constant 0 : index
    %c0_22 = arith.constant 0 : index
    %31 = vector.load %arg11[%c0_20, %c0_21, %c0_22] : memref<2x8x128xf32, #tpu.memory_space<vmem>>, vector<2x8x128xf32>
    tpu.vector_store %arg11[%c0_20, %c0_21, %c0_22], %30 {strides = array<i32>} : memref<2x8x128xf32, #tpu.memory_space<vmem>>, vector<2x8x128xf32>,
    %c0_23 = arith.constant 0 : index
    %c0_24 = arith.constant 0 : index
    %c0_25 = arith.constant 0 : index
    %32 = vector.load %arg12[%c0_23, %c0_24, %c0_25] : memref<2x8x1xf32, #tpu.memory_space<vmem>>, vector<2x8x1xf32>
    %cst_26 = arith.constant dense<0.000000e+00> : vector<2x8xf32>
    %33 = vector.multi_reduction <add>, %13, %cst_26 [2] : vector<2x8x128xf32> to vector<2x8xf32>
    %34 = vector.shape_cast %33 : vector<2x8xf32> to vector<2x8x1xf32>
    %35 = arith.addf %32, %34 : vector<2x8x1xf32>
    %c0_27 = arith.constant 0 : index
    %c0_28 = arith.constant 0 : index
    %c0_29 = arith.constant 0 : index
    %36 = vector.load %arg12[%c0_27, %c0_28, %c0_29] : memref<2x8x1xf32, #tpu.memory_space<vmem>>, vector<2x8x1xf32>
    tpu.vector_store %arg12[%c0_27, %c0_28, %c0_29], %35 {strides = array<i32>} : memref<2x8x1xf32, #tpu.memory_space<vmem>>, vector<2x8x1xf32>,
    %c0_30 = arith.constant 0 : index
    %c0_31 = arith.constant 0 : index
    %c0_32 = arith.constant 0 : index
    %37 = vector.load %arg13[%c0_30, %c0_31, %c0_32] : memref<2x8x1xf32, #tpu.memory_space<vmem>>, vector<2x8x1xf32>
    %cst_33 = arith.constant dense<0.000000e+00> : vector<2x8xf32>
    %38 = vector.multi_reduction <add>, %21, %cst_33 [2] : vector<2x8x128xf32> to vector<2x8xf32>
    %39 = vector.shape_cast %38 : vector<2x8xf32> to vector<2x8x1xf32>
    %40 = arith.addf %37, %39 : vector<2x8x1xf32>
    %c0_34 = arith.constant 0 : index
    %c0_35 = arith.constant 0 : index
    %c0_36 = arith.constant 0 : index
    %41 = vector.load %arg13[%c0_34, %c0_35, %c0_36] : memref<2x8x1xf32, #tpu.memory_space<vmem>>, vector<2x8x1xf32>
    tpu.vector_store %arg13[%c0_34, %c0_35, %c0_36], %40 {strides = array<i32>} : memref<2x8x1xf32, #tpu.memory_space<vmem>>, vector<2x8x1xf32>,
    %c0_37 = arith.constant 0 : index
    %c0_38 = arith.constant 0 : index
    %c0_39 = arith.constant 0 : index
    %42 = vector.load %arg14[%c0_37, %c0_38, %c0_39] : memref<2x1x128xf32, #tpu.memory_space<vmem>>, vector<2x1x128xf32>
    %cst_40 = arith.constant dense<0.000000e+00> : vector<2x128xf32>
    %43 = vector.multi_reduction <add>, %5, %cst_40 [1] : vector<2x128x128xf32> to vector<2x128xf32>
    %44 = vector.shape_cast %43 : vector<2x128xf32> to vector<2x1x128xf32>
    %45 = arith.addf %42, %44 : vector<2x1x128xf32>
    %c0_41 = arith.constant 0 : index
    %c0_42 = arith.constant 0 : index
    %c0_43 = arith.constant 0 : index
    %46 = vector.load %arg14[%c0_41, %c0_42, %c0_43] : memref<2x1x128xf32, #tpu.memory_space<vmem>>, vector<2x1x128xf32>
    tpu.vector_store %arg14[%c0_41, %c0_42, %c0_43], %45 {strides = array<i32>} : memref<2x1x128xf32, #tpu.memory_space<vmem>>, vector<2x1x128xf32>,
    %c0_i32_44 = arith.constant 0 : i32
    %47 = arith.cmpi eq, %arg1, %c0_i32_44 : i32
    %48 = arith.extui %47 : i1 to i32
    %c0_i32_45 = arith.constant 0 : i32
    %49 = arith.cmpi ne, %48, %c0_i32_45 : i32
    scf.if %49 {
      %c0_46 = arith.constant 0 : index
      %c0_47 = arith.constant 0 : index
      %c0_48 = arith.constant 0 : index
      %50 = vector.load %arg3[%c0_46, %c0_47, %c0_48] : memref<2x8x19xf32, #tpu.memory_space<vmem>>, vector<2x8x19xf32>
      %c0_49 = arith.constant 0 : index
      %c0_50 = arith.constant 0 : index
      %c0_51 = arith.constant 0 : index
      %51 = vector.load %arg6[%c0_49, %c0_50, %c0_51] : memref<2x19x128xf32, #tpu.memory_space<vmem>>, vector<2x19x128xf32>
      %c0_52 = arith.constant 0 : index
      %c0_53 = arith.constant 0 : index
      %c0_54 = arith.constant 0 : index
      %52 = vector.load %arg4[%c0_52, %c0_53, %c0_54] : memref<2x8x3xf32, #tpu.memory_space<vmem>>, vector<2x8x3xf32>
      %c0_55 = arith.constant 0 : index
      %c0_56 = arith.constant 0 : index
      %c0_57 = arith.constant 0 : index
      %53 = vector.load %arg5[%c0_55, %c0_56, %c0_57] : memref<2x3x128xf32, #tpu.memory_space<vmem>>, vector<2x3x128xf32>
      %cst_58 = arith.constant dense<0xFF800000> : vector<2x8xf32>
      %54 = vector.multi_reduction <maximumf>, %50, %cst_58 [2] : vector<2x8x19xf32> to vector<2x8xf32>
      %55 = vector.shape_cast %54 : vector<2x8xf32> to vector<2x8x1xf32>
      %56 = vector.broadcast %55 : vector<2x8x1xf32> to vector<2x8x19xf32>
      %57 = arith.subf %50, %56 : vector<2x8x19xf32>
      %58 = math.exp %57 : vector<2x8x19xf32>
      %cst_59 = arith.constant dense<0.000000e+00> : vector<2x8xf32>
      %59 = vector.multi_reduction <add>, %58, %cst_59 [2] : vector<2x8x19xf32> to vector<2x8xf32>
      %60 = vector.shape_cast %59 : vector<2x8xf32> to vector<2x8x1xf32>
      "tpu.trace_start"() <{level = 10 : i32, message = "bqc,bcm->bqm"}> : () -> ()
      %cst_60 = arith.constant dense<0.000000e+00> : vector<2x8x128xf32>
      %61 = tpu.matmul %58, %51, %cst_60 {dimension_numbers = #tpu.dot_dimension_numbers<[2], [1], [1], [2], [0, 0, 0, 1, 1, 2], [0], [0]>} : vector<2x8x19xf32>, vector<2x19x128xf32>, vector<2x8x128xf32> -> vector<2x8x128xf32>
      "tpu.trace_stop"() : () -> ()
      %cst_61 = arith.constant 0.000000e+00 : f32
      %62 = vector.broadcast %cst_61 : f32 to vector<2x8x128xf32>
      %63 = arith.subf %62, %61 : vector<2x8x128xf32>
      %64 = tpu.reciprocal %60 {approx = true} : vector<2x8x1xf32> -> vector<2x8x1xf32>
      %65 = vector.broadcast %64 : vector<2x8x1xf32> to vector<2x8x128xf32>
      %66 = arith.mulf %63, %65 : vector<2x8x128xf32>
      %c0_62 = arith.constant 0 : index
      %c0_63 = arith.constant 0 : index
      %c0_64 = arith.constant 0 : index
      %67 = vector.load %arg12[%c0_62, %c0_63, %c0_64] : memref<2x8x1xf32, #tpu.memory_space<vmem>>, vector<2x8x1xf32>
      %c0_65 = arith.constant 0 : index
      %c0_66 = arith.constant 0 : index
      %c0_67 = arith.constant 0 : index
      %68 = vector.load %arg10[%c0_65, %c0_66, %c0_67] : memref<2x8x128xf32, #tpu.memory_space<vmem>>, vector<2x8x128xf32>
      %69 = vector.broadcast %67 : vector<2x8x1xf32> to vector<2x8x128xf32>
      %70 = arith.subf %69, %68 : vector<2x8x128xf32>
      %cst_68 = arith.constant 7.812500e-03 : f32
      %71 = vector.broadcast %cst_68 : f32 to vector<2x8x128xf32>
      %72 = arith.mulf %70, %71 : vector<2x8x128xf32>
      %c0_69 = arith.constant 0 : index
      %c0_70 = arith.constant 0 : index
      %c0_71 = arith.constant 0 : index
      %73 = vector.load %arg13[%c0_69, %c0_70, %c0_71] : memref<2x8x1xf32, #tpu.memory_space<vmem>>, vector<2x8x1xf32>
      %c0_72 = arith.constant 0 : index
      %c0_73 = arith.constant 0 : index
      %c0_74 = arith.constant 0 : index
      %74 = vector.load %arg14[%c0_72, %c0_73, %c0_74] : memref<2x1x128xf32, #tpu.memory_space<vmem>>, vector<2x1x128xf32>
      %75 = vector.broadcast %73 : vector<2x8x1xf32> to vector<2x8x128xf32>
      %76 = vector.broadcast %74 : vector<2x1x128xf32> to vector<2x8x128xf32>
      %77 = arith.addf %75, %76 : vector<2x8x128xf32>
      %cst_75 = arith.constant 1.000000e+00 : f32
      %78 = vector.broadcast %cst_75 : f32 to vector<2x8x128xf32>
      %79 = arith.addf %77, %78 : vector<2x8x128xf32>
      %c0_76 = arith.constant 0 : index
      %c0_77 = arith.constant 0 : index
      %c0_78 = arith.constant 0 : index
      %80 = vector.load %arg11[%c0_76, %c0_77, %c0_78] : memref<2x8x128xf32, #tpu.memory_space<vmem>>, vector<2x8x128xf32>
      %cst_79 = arith.constant 2.000000e+00 : f32
      %81 = vector.broadcast %cst_79 : f32 to vector<2x8x128xf32>
      %82 = arith.mulf %81, %80 : vector<2x8x128xf32>
      %cst_80 = arith.constant 1.000000e+00 : f32
      %83 = vector.broadcast %cst_80 : f32 to vector<2x8x128xf32>
      %84 = arith.addf %82, %83 : vector<2x8x128xf32>
      %85 = tpu.reciprocal %79 {approx = true} : vector<2x8x128xf32> -> vector<2x8x128xf32>
      %86 = arith.mulf %84, %85 : vector<2x8x128xf32>
      %cst_81 = arith.constant 1.000000e+00 : f32
      %87 = vector.broadcast %cst_81 : f32 to vector<2x8x128xf32>
      %88 = arith.subf %87, %86 : vector<2x8x128xf32>
      %89 = vector.extract_strided_slice %52 {offsets = [0, 0, 0], sizes = [2, 8, 1], strides = [1, 1, 1]} : vector<2x8x3xf32> to vector<2x8x1xf32>
      %90 = vector.extract_strided_slice %53 {offsets = [0, 0, 0], sizes = [2, 1, 128], strides = [1, 1, 1]} : vector<2x3x128xf32> to vector<2x1x128xf32>
      %91 = vector.broadcast %89 : vector<2x8x1xf32> to vector<2x8x128xf32>
      %92 = vector.broadcast %90 : vector<2x1x128xf32> to vector<2x8x128xf32>
      %93 = arith.subf %91, %92 : vector<2x8x128xf32>
      %94 = math.absf %93 : vector<2x8x128xf32>
      %95 = vector.extract_strided_slice %52 {offsets = [0, 0, 1], sizes = [2, 8, 1], strides = [1, 1, 1]} : vector<2x8x3xf32> to vector<2x8x1xf32>
      %96 = vector.extract_strided_slice %53 {offsets = [0, 1, 0], sizes = [2, 1, 128], strides = [1, 1, 1]} : vector<2x3x128xf32> to vector<2x1x128xf32>
      %97 = vector.broadcast %95 : vector<2x8x1xf32> to vector<2x8x128xf32>
      %98 = vector.broadcast %96 : vector<2x1x128xf32> to vector<2x8x128xf32>
      %99 = arith.subf %97, %98 : vector<2x8x128xf32>
      %100 = math.absf %99 : vector<2x8x128xf32>
      %101 = arith.addf %94, %100 : vector<2x8x128xf32>
      %102 = vector.extract_strided_slice %52 {offsets = [0, 0, 2], sizes = [2, 8, 1], strides = [1, 1, 1]} : vector<2x8x3xf32> to vector<2x8x1xf32>
      %103 = vector.extract_strided_slice %53 {offsets = [0, 2, 0], sizes = [2, 1, 128], strides = [1, 1, 1]} : vector<2x3x128xf32> to vector<2x1x128xf32>
      %104 = vector.broadcast %102 : vector<2x8x1xf32> to vector<2x8x128xf32>
      %105 = vector.broadcast %103 : vector<2x1x128xf32> to vector<2x8x128xf32>
      %106 = arith.subf %104, %105 : vector<2x8x128xf32>
      %107 = math.absf %106 : vector<2x8x128xf32>
      %108 = arith.addf %101, %107 : vector<2x8x128xf32>
      %c0_82 = arith.constant 0 : index
      %109 = memref.load %arg2[%c0_82] : memref<4xf32, #tpu.memory_space<smem>>
      %110 = vector.broadcast %109 : f32 to vector<2x8x128xf32>
      %111 = arith.mulf %110, %66 : vector<2x8x128xf32>
      %c1 = arith.constant 1 : index
      %112 = memref.load %arg2[%c1] : memref<4xf32, #tpu.memory_space<smem>>
      %113 = vector.broadcast %112 : f32 to vector<2x8x128xf32>
      %114 = arith.mulf %113, %72 : vector<2x8x128xf32>
      %115 = arith.addf %111, %114 : vector<2x8x128xf32>
      %c2 = arith.constant 2 : index
      %116 = memref.load %arg2[%c2] : memref<4xf32, #tpu.memory_space<smem>>
      %117 = vector.broadcast %116 : f32 to vector<2x8x128xf32>
      %118 = arith.mulf %117, %88 : vector<2x8x128xf32>
      %119 = arith.addf %115, %118 : vector<2x8x128xf32>
      %c3 = arith.constant 3 : index
      %120 = memref.load %arg2[%c3] : memref<4xf32, #tpu.memory_space<smem>>
      %121 = vector.broadcast %120 : f32 to vector<2x8x128xf32>
      %122 = arith.mulf %121, %108 : vector<2x8x128xf32>
      %123 = arith.addf %119, %122 : vector<2x8x128xf32>
      %124 = arith.cmpf one, %123, %123 : vector<2x8x128xf32>
      %cst_83 = arith.constant 0.000000e+00 : f32
      %125 = vector.broadcast %cst_83 : f32 to vector<2x8x128xf32>
      %126 = arith.select %124, %125, %123 : vector<2x8x128xi1>, vector<2x8x128xf32>
      %cst_84 = arith.constant 0x7F800000 : f32
      %127 = vector.broadcast %cst_84 : f32 to vector<2x8x128xf32>
      %128 = arith.cmpf oeq, %126, %127 : vector<2x8x128xf32>
      %cst_85 = arith.constant 3.40282347E+38 : f32
      %129 = vector.broadcast %cst_85 : f32 to vector<2x8x128xf32>
      %130 = arith.select %128, %129, %126 : vector<2x8x128xi1>, vector<2x8x128xf32>
      %cst_86 = arith.constant 0xFF800000 : f32
      %131 = vector.broadcast %cst_86 : f32 to vector<2x8x128xf32>
      %132 = arith.cmpf oeq, %130, %131 : vector<2x8x128xf32>
      %cst_87 = arith.constant -3.40282347E+38 : f32
      %133 = vector.broadcast %cst_87 : f32 to vector<2x8x128xf32>
      %134 = arith.select %132, %133, %130 : vector<2x8x128xi1>, vector<2x8x128xf32>
      %c0_88 = arith.constant 0 : index
      %c0_89 = arith.constant 0 : index
      %c0_90 = arith.constant 0 : index
      %135 = vector.load %arg9[%c0_88, %c0_89, %c0_90] : memref<2x8x128xf32, #tpu.memory_space<vmem>>, vector<2x8x128xf32>
      tpu.vector_store %arg9[%c0_88, %c0_89, %c0_90], %134 {strides = array<i32>} : memref<2x8x128xf32, #tpu.memory_space<vmem>>, vector<2x8x128xf32>,
    } else {
    }
    return
  }
  func.func @transform_0(%arg0: i32, %arg1: i32) -> i32 {
    %c0_i32 = arith.constant 0 : i32
    %c0_i32_0 = arith.constant 0 : i32
    return %c0_i32 : i32
  }
  func.func @transform_1(%arg0: i32, %arg1: i32) -> (i32, i32, i32) {
    %c0_i32 = arith.constant 0 : i32
    %c0_i32_0 = arith.constant 0 : i32
    %c0_i32_1 = arith.constant 0 : i32
    return %arg0, %c0_i32, %c0_i32_0 : i32, i32, i32
  }
  func.func @transform_2(%arg0: i32, %arg1: i32) -> (i32, i32, i32) {
    %c0_i32 = arith.constant 0 : i32
    %c0_i32_0 = arith.constant 0 : i32
    %c0_i32_1 = arith.constant 0 : i32
    return %arg0, %c0_i32, %c0_i32_0 : i32, i32, i32
  }
  func.func @transform_3(%arg0: i32, %arg1: i32) -> (i32, i32, i32) {
    %c0_i32 = arith.constant 0 : i32
    %c0_i32_0 = arith.constant 0 : i32
    %c0_i32_1 = arith.constant 0 : i32
    return %arg0, %c0_i32, %c0_i32_0 : i32, i32, i32
  }
  func.func @transform_4(%arg0: i32, %arg1: i32) -> (i32, i32, i32) {
    %c0_i32 = arith.constant 0 : i32
    %c0_i32_0 = arith.constant 0 : i32
    %c0_i32_1 = arith.constant 0 : i32
    return %arg0, %c0_i32, %c0_i32_0 : i32, i32, i32
  }
  func.func @transform_5(%arg0: i32, %arg1: i32) -> (i32, i32, i32) {
    %c0_i32 = arith.constant 0 : i32
    %c0_i32_0 = arith.constant 0 : i32
    return %arg0, %c0_i32, %arg1 : i32, i32, i32
  }
  func.func @transform_6(%arg0: i32, %arg1: i32) -> (i32, i32, i32) {
    %c0_i32 = arith.constant 0 : i32
    %c0_i32_0 = arith.constant 0 : i32
    return %arg0, %arg1, %c0_i32 : i32, i32, i32
  }
  func.func @transform_7(%arg0: i32, %arg1: i32) -> (i32, i32, i32) {
    %c0_i32 = arith.constant 0 : i32
    %c0_i32_0 = arith.constant 0 : i32
    %c0_i32_1 = arith.constant 0 : i32
    return %arg0, %c0_i32, %c0_i32_0 : i32, i32, i32
  }
}

</mosaic_0001>

<llo_original>
// kernel: hungarian_cost_matrix.1
$region0: #{hungarian_cost_matrix.1}
  #allocation0 [shape = 'u32[]', space=smem, size = 0x4, offset = 0x4, fixed_abs, tag = 'smem constant byte address 0x4 - core index']
  #allocation1 [shape = 'u32[144,128]{1,0:T(1,128)}', space=vmem, size = 0x12000, scoped, tag = 'internal scratch']
  #allocation2 [shape = 'f32[2,8,128]{2,1,0:T(8,128)}', space=vmem, size = 0x2000, scoped, tag = 'scratch operand']
  #allocation3 [shape = 'f32[2,8,128]{2,1,0:T(8,128)}', space=vmem, size = 0x2000, scoped, tag = 'scratch operand']
  #allocation4 [shape = 'f32[2,8,1]{2,1,0:T(8,128)}', space=vmem, size = 0x2000, scoped, tag = 'scratch operand']
  #allocation5 [shape = 'f32[2,8,1]{2,1,0:T(8,128)}', space=vmem, size = 0x2000, scoped, tag = 'scratch operand']
  #allocation6 [shape = 'f32[2,1,128]{2,1,0:T(1,128)}', space=vmem, size = 0x400, scoped, tag = 'scratch operand']
  %s0 = inlined_call_operand.vmem [shape: f32[4], index: 0, kind: input, shape index: {}]
  %s1 = inlined_call_operand.vmem [shape: f32[2,8,19], index: 1, kind: input, shape index: {}]
  %s2 = inlined_call_operand.vmem [shape: f32[2,8,3], index: 2, kind: input, shape index: {}]
  %s3 = inlined_call_operand.vmem [shape: f32[2,3,128], index: 3, kind: input, shape index: {}]
  %s4 = inlined_call_operand.vmem [shape: f32[2,19,128], index: 4, kind: input, shape index: {}]
  %s5 = inlined_call_operand.vmem [shape: f32[2,8,128], index: 5, kind: input, shape index: {}]
  %s6 = inlined_call_operand.vmem [shape: bf16[2,128,128], index: 6, kind: input, shape index: {}]
  %s7 = inlined_call_operand.vmem [shape: f32[2,8,128], index: 7, kind: output, shape index: {}]
  %s8 = sld [smem:[#allocation0]]
  $region50: #{hungarian_cost_matrix.1} parent=0
    _
  %s10 = ssub.s32 1, %s8
  %s11 = scalar_select 0, %s10, %s8
  $region1: #{hungarian_cost_matrix.1} parent=0
    #allocation7 [shape = 'u8[512]{0}', space=smem, size = 0x200, scoped, tag = 'input window, operand 0, single buffered']
    #allocation8 [shape = 's32[1]{0}', space=sflag, size = 0x4, scoped, tag = 'scoped memory for hungarian_cost_matrix.1']
    %12 = vsyncpa [#allocation8], 0
    // Predicated region
    $region2: #{hungarian_cost_matrix.1} parent=1 // pred_check
      _
    $region3: #{hungarian_cost_matrix.1} parent=1 // pred_check_branch
      %14 = sbr.rel (0) target = $region5
    $region4: #{hungarian_cost_matrix.1} parent=1 // pred_region
      %s16 = ssub.s32 16, 16
      %17 = vsyncadd [#allocation8], %s16
      %s19 = sshll.u32 %s0, 4
      %s20 = int_to_ptr.vmem [resolvable:$true] %s19
      %22 = dma.vmem_to_smem %s20, 16, [#allocation7], [#allocation8]
    $region5: #{hungarian_cost_matrix.1} parent=1 // pred_fallthru
      _
    // Predicated region
    $region6: #{hungarian_cost_matrix.1} parent=1 // pred_check
      _
    $region7: #{hungarian_cost_matrix.1} parent=1 // pred_check_branch
      %24 = sbr.rel (0) target = $region9
    $region8: #{hungarian_cost_matrix.1} parent=1 // pred_region
      _
    $region9: #{hungarian_cost_matrix.1} parent=1 // pred_fallthru
      _
    // Predicated region
    $region10: #{hungarian_cost_matrix.1} parent=1 // pred_check
      _
    $region11: #{hungarian_cost_matrix.1} parent=1 // pred_check_branch
      %26 = sbr.rel (0) target = $region13
    $region12: #{hungarian_cost_matrix.1} parent=1 // pred_region
      _
    $region13: #{hungarian_cost_matrix.1} parent=1 // pred_fallthru
      _
    // Predicated region
    $region14: #{hungarian_cost_matrix.1} parent=1 // pred_check
      _
    $region15: #{hungarian_cost_matrix.1} parent=1 // pred_check_branch
      %28 = sbr.rel (0) target = $region17
    $region16: #{hungarian_cost_matrix.1} parent=1 // pred_region
      _
    $region17: #{hungarian_cost_matrix.1} parent=1 // pred_fallthru
      _
    // Predicated region
    $region18: #{hungarian_cost_matrix.1} parent=1 // pred_check
      _
    $region19: #{hungarian_cost_matrix.1} parent=1 // pred_check_branch
      %30 = sbr.rel (0) target = $region21
    $region20: #{hungarian_cost_matrix.1} parent=1 // pred_region
      _
    $region21: #{hungarian_cost_matrix.1} parent=1 // pred_fallthru
      _
    // Predicated region
    $region22: #{hungarian_cost_matrix.1} parent=1 // pred_check
      _
    $region23: #{hungarian_cost_matrix.1} parent=1 // pred_check_branch
      %32 = sbr.rel (0) target = $region25
    $region24: #{hungarian_cost_matrix.1} parent=1 // pred_region
      _
    $region25: #{hungarian_cost_matrix.1} parent=1 // pred_fallthru
      _
    // Predicated region
    $region26: #{hungarian_cost_matrix.1} parent=1 // pred_check
      _
    $region27: #{hungarian_cost_matrix.1} parent=1 // pred_check_branch
      %34 = sbr.rel (0) target = $region29
    $region28: #{hungarian_cost_matrix.1} parent=1 // pred_region
      _
    $region29: #{hungarian_cost_matrix.1} parent=1 // pred_fallthru
      _
    // Predicated region
    $region30: #{hungarian_cost_matrix.1} parent=1 // pred_check
      _
    $region31: #{hungarian_cost_matrix.1} parent=1 // pred_check_branch
      %36 = sbr.rel (0) target = $region33
    $region32: #{hungarian_cost_matrix.1} parent=1 // pred_region
      %37 = dma.done [#allocation8], 16
    $region33: #{hungarian_cost_matrix.1} parent=1 // pred_fallthru
      _
    %38 = sfence
    %p39 = scmp.eq.s32.totalorder 0, 0
    // Predicated region
    $region34: #{hungarian_cost_matrix.1} parent=1 // pred_check
      %p40 = pneg %p39
    $region35: #{hungarian_cost_matrix.1} parent=1 // pred_check_branch
      %42 = sbr.rel (%p40) target = $region37
    $region36: #{hungarian_cost_matrix.1} parent=1 // pred_region
      %43 = vst [vmem:[#allocation2] sm:$0xff] 0.0
      %44 = vst [vmem:[#allocation2 + $0x8] sm:$0xff] 0.0
      %45 = vst [vmem:[#allocation3] sm:$0xff] 0.0
      %46 = vst [vmem:[#allocation3 + $0x8] sm:$0xff] 0.0
      %vm47 = vcmask 7168
      %48 = vst.msk [vmem:[#allocation4] sm:$0xff] %vm47, 0.0
      %49 = vst.msk [vmem:[#allocation4 + $0x8] sm:$0xff] %vm47, 0.0
      %50 = vst.msk [vmem:[#allocation5] sm:$0xff] %vm47, 0.0
      %51 = vst.msk [vmem:[#allocation5 + $0x8] sm:$0xff] %vm47, 0.0
      %52 = vst [vmem:[#allocation6] sm:$0x1] 0.0
      %53 = vst [vmem:[#allocation6 + $0x1] sm:$0x1] 0.0
    $region37: #{hungarian_cost_matrix.1} parent=1 // pred_fallthru
      _
    %v54 = vld [vmem:[%s5] sm:$0xff]
    %v55 = vld [vmem:[%s5 + $0x8] sm:$0xff]
    %v56 = vld [vmem:[%s6] sm:$0xf]
    %v57 = vld [vmem:[%s6 + $0x4] sm:$0xf]
    %v58 = vld [vmem:[%s6 + $0x8] sm:$0xf]
    %v59 = vld [vmem:[%s6 + $0xc] sm:$0xf]
    %v60 = vld [vmem:[%s6 + $0x10] sm:$0xf]
    %v61 = vld [vmem:[%s6 + $0x14] sm:$0xf]
    %v62 = vld [vmem:[%s6 + $0x18] sm:$0xf]
    %v63 = vld [vmem:[%s6 + $0x1c] sm:$0xf]
    %v64 = vld [vmem:[%s6 + $0x20] sm:$0xf]
    %v65 = vld [vmem:[%s6 + $0x24] sm:$0xf]
    %v66 = vld [vmem:[%s6 + $0x28] sm:$0xf]
    %v67 = vld [vmem:[%s6 + $0x2c] sm:$0xf]
    %v68 = vld [vmem:[%s6 + $0x30] sm:$0xf]
    %v69 = vld [vmem:[%s6 + $0x34] sm:$0xf]
    %v70 = vld [vmem:[%s6 + $0x38] sm:$0xf]
    %v71 = vld [vmem:[%s6 + $0x3c] sm:$0xf]
    %v72 = vld [vmem:[%s6 + $0x40] sm:$0xf]
    %v73 = vld [vmem:[%s6 + $0x44] sm:$0xf]
    %v74 = vld [vmem:[%s6 + $0x48] sm:$0xf]
    %v75 = vld [vmem:[%s6 + $0x4c] sm:$0xf]
    %v76 = vld [vmem:[%s6 + $0x50] sm:$0xf]
    %v77 = vld [vmem:[%s6 + $0x54] sm:$0xf]
    %v78 = vld [vmem:[%s6 + $0x58] sm:$0xf]
    %v79 = vld [vmem:[%s6 + $0x5c] sm:$0xf]
    %v80 = vld [vmem:[%s6 + $0x60] sm:$0xf]
    %v81 = vld [vmem:[%s6 + $0x64] sm:$0xf]
    %v82 = vld [vmem:[%s6 + $0x68] sm:$0xf]
    %v83 = vld [vmem:[%s6 + $0x6c] sm:$0xf]
    %v84 = vld [vmem:[%s6 + $0x70] sm:$0xf]
    %v85 = vld [vmem:[%s6 + $0x74] sm:$0xf]
    %v86 = vld [vmem:[%s6 + $0x78] sm:$0xf]
    %v87 = vld [vmem:[%s6 + $0x7c] sm:$0xf]
    %v88 = vunpack.c.l.bf16 %v56
    %v89 = vunpack.c.l.bf16 %v57
    %v90 = vunpack.c.l.bf16 %v58
    %v91 = vunpack.c.l.bf16 %v59
    %v92 = vunpack.c.l.bf16 %v60
    %v93 = vunpack.c.l.bf16 %v61
    %v94 = vunpack.c.l.bf16 %v62
    %v95 = vunpack.c.l.bf16 %v63
    %v96 = vunpack.c.l.bf16 %v64
    %v97 = vunpack.c.l.bf16 %v65
    %v98 = vunpack.c.l.bf16 %v66
    %v99 = vunpack.c.l.bf16 %v67
    %v100 = vunpack.c.l.bf16 %v68
    %v101 = vunpack.c.l.bf16 %v69
    %v102 = vunpack.c.l.bf16 %v70
    %v103 = vunpack.c.l.bf16 %v71
    %v104 = vunpack.c.l.bf16 %v72
    %v105 = vunpack.c.l.bf16 %v73
    %v106 = vunpack.c.l.bf16 %v74
    %v107 = vunpack.c.l.bf16 %v75
    %v108 = vunpack.c.l.bf16 %v76
    %v109 = vunpack.c.l.bf16 %v77
    %v110 = vunpack.c.l.bf16 %v78
    %v111 = vunpack.c.l.bf16 %v79
    %v112 = vunpack.c.l.bf16 %v80
    %v113 = vunpack.c.l.bf16 %v81
    %v114 = vunpack.c.l.bf16 %v82
    %v115 = vunpack.c.l.bf16 %v83
    %v116 = vunpack.c.l.bf16 %v84
    %v117 = vunpack.c.l.bf16 %v85
    %v118 = vunpack.c.l.bf16 %v86
    %v119 = vunpack.c.l.bf16 %v87
    %v120 = vand.u32 2147483647, %v54
    %v121 = vand.u32 2147483647, %v55
    %v122 = vsub.f32 0.0, %v120
    %v123 = vsub.f32 0.0, %v121
    %v124 = vmul.f32 %v122, 1.442695
    %v125 = vpow.pop %v124
    %v126 = vmul.f32 %v123, 1.442695
    %v127 = vpow.pop %v126
    %v128 = vmax.f32 %v54, 0.0
    %v129 = vmax.f32 %v55, 0.0
    %v130 = vadd.f32 %v125, 1.0
    %v131 = vlog2.pop %v130
    %v132 = vmul.f32 %v131, 0.6931472
    %v133 = vmul.f32 -0.5, %v125
    %v134 = vadd.f32 %v133, 1.0
    %v135 = vmul.f32 %v134, %v125
    %v136 = vand.u32 2147483647, %v125
    %vm137 = vcmp.lt.f32.partialorder %v136, 0.0004427343
    %v138 = vsel %vm137, %v135, %v132
    %v139 = vadd.f32 %v127, 1.0
    %v140 = vlog2.pop %v139
    %v141 = vmul.f32 %v140, 0.6931472
    %v142 = vmul.f32 -0.5, %v127
    %v143 = vadd.f32 %v142, 1.0
    %v144 = vmul.f32 %v143, %v127
    %v145 = vand.u32 2147483647, %v127
    %vm146 = vcmp.lt.f32.partialorder %v145, 0.0004427343
    %v147 = vsel %vm146, %v144, %v141
    %v148 = vadd.f32 %v128, %v138
    %v149 = vadd.f32 %v129, %v147
    %vm150 = vcmp.ge.f32.partialorder %v54, 0.0
    %vm151 = vcmp.ge.f32.partialorder %v55, 0.0
    %v152 = vsel %vm150, 1.0, %v125
    %v153 = vsel %vm151, 1.0, %v127
    %v154 = vadd.f32 %v125, 1.0
    %v155 = vadd.f32 %v127, 1.0
    %v156 = vrcp.pop %v154
    %v157 = vrcp.pop %v155
    %v158 = vmul.f32 %v152, %v156
    %v159 = vmul.f32 %v153, %v157
    %160 = vmatprep.subr.mxu0 0.0
    %161 = vmatpush1.msra.mxu0 %v88
    %162 = vmatprep.subr.mxu0 0.0
    %163 = vmatpush1.msra.mxu0 %v89
    %164 = vmatprep.subr.mxu0 0.0
    %165 = vmatpush1.msra.mxu0 %v90
    %166 = vmatprep.subr.mxu0 0.0
    %167 = vmatpush1.msra.mxu0 %v91
    %168 = vmatprep.subr.mxu0 0.0
    %169 = vmatpush1.msra.mxu0 %v92
    %170 = vmatprep.subr.mxu0 0.0
    %171 = vmatpush1.msra.mxu0 %v93
    %172 = vmatprep.subr.mxu0 0.0
    %173 = vmatpush1.msra.mxu0 %v94
    %174 = vmatprep.subr.mxu0 0.0
    %175 = vmatpush1.msra.mxu0 %v95
    %176 = vmatprep.subr.mxu0 0.0
    %177 = vmatpush1.msra.mxu0 %v96
    %178 = vmatprep.subr.mxu0 0.0
    %179 = vmatpush1.msra.mxu0 %v97
    %180 = vmatprep.subr.mxu0 0.0
    %181 = vmatpush1.msra.mxu0 %v98
    %182 = vmatprep.subr.mxu0 0.0
    %183 = vmatpush1.msra.mxu0 %v99
    %184 = vmatprep.subr.mxu0 0.0
    %185 = vmatpush1.msra.mxu0 %v100
    %186 = vmatprep.subr.mxu0 0.0
    %187 = vmatpush1.msra.mxu0 %v101
    %188 = vmatprep.subr.mxu0 0.0
    %189 = vmatpush1.msra.mxu0 %v102
    %190 = vmatprep.subr.mxu0 0.0
    %191 = vmatpush1.msra.mxu0 %v103
    %192 = vmatprep.subr.mxu0 0.0
    %193 = vmatpush1.msra.mxu0 0.0
    %194 = vmatprep.subr.mxu0 0.0
    %195 = vmatpush1.msra.mxu0 0.0
    %196 = vmatprep.subr.mxu0 0.0
    %197 = vmatpush1.msra.mxu0 0.0
    %198 = vmatprep.subr.mxu0 0.0
    %199 = vmatpush1.msra.mxu0 0.0
    %200 = vmatprep.subr.mxu0 0.0
    %201 = vmatpush1.msra.mxu0 0.0
    %202 = vmatprep.subr.mxu0 0.0
    %203 = vmatpush1.msra.mxu0 0.0
    %204 = vmatprep.subr.mxu0 0.0
    %205 = vmatpush1.msra.mxu0 0.0
    %206 = vmatprep.subr.mxu0 0.0
    %207 = vmatpush1.msra.mxu0 0.0
    %208 = vmatprep.subr.mxu0 0.0
    %209 = vmatpush1.msra.mxu0 0.0
    %210 = vmatprep.subr.mxu0 0.0
    %211 = vmatpush1.msra.mxu0 0.0
    %212 = vmatprep.subr.mxu0 0.0
    %213 = vmatpush1.msra.mxu0 0.0
    %214 = vmatprep.subr.mxu0 0.0
    %215 = vmatpush1.msra.mxu0 0.0
    %216 = vmatprep.subr.mxu0 0.0
    %217 = vmatpush1.msra.mxu0 0.0
    %218 = vmatprep.subr.mxu0 0.0
    %219 = vmatpush1.msra.mxu0 0.0
    %220 = vmatprep.subr.mxu0 0.0
    %221 = vmatpush1.msra.mxu0 0.0
    %222 = vmatprep.subr.mxu0 0.0
    %223 = vmatpush1.msra.mxu0 0.0
    %224 = vmatprep.mubr.f32.mxu0 0.0
    %225 = vmatmul.mubr.f32.gmra.mrb[0].mxu0 %v54
    %v226 = vpop.f32.mrb[0].mxu0
    %v227 = vadd.f32 0.0, %v226
    %v228 = vpop.f32.mrb[0].mxu0
    %229 = vmatprep.mubr.f32.mxu0 0.0
    %230 = vmatmul.mubr.f32.gmra.mrb[0].mxu0 %v158
    %v231 = vpop.f32.mrb[0].mxu0
    %v232 = vadd.f32 0.0, %v231
    %v233 = vpop.f32.mrb[0].mxu0
    %234 = vdwg.mxu0
    %235 = vmatprep.subr.mxu0 0.0
    %236 = vmatpush1.msra.mxu0 %v104
    %237 = vmatprep.subr.mxu0 0.0
    %238 = vmatpush1.msra.mxu0 %v105
    %239 = vmatprep.subr.mxu0 0.0
    %240 = vmatpush1.msra.mxu0 %v106
    %241 = vmatprep.subr.mxu0 0.0
    %242 = vmatpush1.msra.mxu0 %v107
    %243 = vmatprep.subr.mxu0 0.0
    %244 = vmatpush1.msra.mxu0 %v108
    %245 = vmatprep.subr.mxu0 0.0
    %246 = vmatpush1.msra.mxu0 %v109
    %247 = vmatprep.subr.mxu0 0.0
    %248 = vmatpush1.msra.mxu0 %v110
    %249 = vmatprep.subr.mxu0 0.0
    %250 = vmatpush1.msra.mxu0 %v111
    %251 = vmatprep.subr.mxu0 0.0
    %252 = vmatpush1.msra.mxu0 %v112
    %253 = vmatprep.subr.mxu0 0.0
    %254 = vmatpush1.msra.mxu0 %v113
    %255 = vmatprep.subr.mxu0 0.0
    %256 = vmatpush1.msra.mxu0 %v114
    %257 = vmatprep.subr.mxu0 0.0
    %258 = vmatpush1.msra.mxu0 %v115
    %259 = vmatprep.subr.mxu0 0.0
    %260 = vmatpush1.msra.mxu0 %v116
    %261 = vmatprep.subr.mxu0 0.0
    %262 = vmatpush1.msra.mxu0 %v117
    %263 = vmatprep.subr.mxu0 0.0
    %264 = vmatpush1.msra.mxu0 %v118
    %265 = vmatprep.subr.mxu0 0.0
    %266 = vmatpush1.msra.mxu0 %v119
    %267 = vmatprep.subr.mxu0 0.0
    %268 = vmatpush1.msra.mxu0 0.0
    %269 = vmatprep.subr.mxu0 0.0
    %270 = vmatpush1.msra.mxu0 0.0
    %271 = vmatprep.subr.mxu0 0.0
    %272 = vmatpush1.msra.mxu0 0.0
    %273 = vmatprep.subr.mxu0 0.0
    %274 = vmatpush1.msra.mxu0 0.0
    %275 = vmatprep.subr.mxu0 0.0
    %276 = vmatpush1.msra.mxu0 0.0
    %277 = vmatprep.subr.mxu0 0.0
    %278 = vmatpush1.msra.mxu0 0.0
    %279 = vmatprep.subr.mxu0 0.0
    %280 = vmatpush1.msra.mxu0 0.0
    %281 = vmatprep.subr.mxu0 0.0
    %282 = vmatpush1.msra.mxu0 0.0
    %283 = vmatprep.subr.mxu0 0.0
    %284 = vmatpush1.msra.mxu0 0.0
    %285 = vmatprep.subr.mxu0 0.0
    %286 = vmatpush1.msra.mxu0 0.0
    %287 = vmatprep.subr.mxu0 0.0
    %288 = vmatpush1.msra.mxu0 0.0
    %289 = vmatprep.subr.mxu0 0.0
    %290 = vmatpush1.msra.mxu0 0.0
    %291 = vmatprep.subr.mxu0 0.0
    %292 = vmatpush1.msra.mxu0 0.0
    %293 = vmatprep.subr.mxu0 0.0
    %294 = vmatpush1.msra.mxu0 0.0
    %295 = vmatprep.subr.mxu0 0.0
    %296 = vmatpush1.msra.mxu0 0.0
    %297 = vmatprep.subr.mxu0 0.0
    %298 = vmatpush1.msra.mxu0 0.0
    %299 = vmatprep.mubr.f32.mxu0 0.0
    %300 = vmatmul.mubr.f32.gmra.mrb[0].mxu0 %v55
    %v301 = vpop.f32.mrb[0].mxu0
    %v302 = vadd.f32 0.0, %v301
    %v303 = vpop.f32.mrb[0].mxu0
    %304 = vmatprep.mubr.f32.mxu0 0.0
    %305 = vmatmul.mubr.f32.gmra.mrb[0].mxu0 %v159
    %v306 = vpop.f32.mrb[0].mxu0
    %v307 = vadd.f32 0.0, %v306
    %v308 = vpop.f32.mrb[0].mxu0
    %309 = vdwg.mxu0
    %v310 = vld [vmem:[#allocation2] sm:$0xff]
    %v311 = vld [vmem:[#allocation2 + $0x8] sm:$0xff]
    %v312 = vadd.f32 %v310, %v227
    %v313 = vadd.f32 %v311, %v302
    %314 = vst [vmem:[#allocation2] sm:$0xff] %v312
    %315 = vst [vmem:[#allocation2 + $0x8] sm:$0xff] %v313
    %v316 = vld [vmem:[#allocation3] sm:$0xff]
    %v317 = vld [vmem:[#allocation3 + $0x8] sm:$0xff]
    %v318 = vadd.f32 %v316, %v232
    %v319 = vadd.f32 %v317, %v307
    %320 = vst [vmem:[#allocation3] sm:$0xff] %v318
    %321 = vst [vmem:[#allocation3 + $0x8] sm:$0xff] %v319
    %v322 = vld [vmem:[#allocation4] sm:$0xff]
    %v323 = vld [vmem:[#allocation4 + $0x8] sm:$0xff]
    %324 = vadd.xlane.f32.xlu0 %v148
    %v325 = vpop.xlane.xlu0 %324
    %326 = vadd.xlane.f32.xlu0 %v149
    %v327 = vpop.xlane.xlu0 %326
    %v328 = vadd.f32 %v322, %v325
    %v329 = vadd.f32 %v323, %v327
    %vm330 = vcmask 7168
    %331 = vst.msk [vmem:[#allocation4] sm:$0xff] %vm330, %v328
    %332 = vst.msk [vmem:[#allocation4 + $0x8] sm:$0xff] %vm330, %v329
    %v333 = vld [vmem:[#allocation5] sm:$0xff]
    %v334 = vld [vmem:[#allocation5 + $0x8] sm:$0xff]
    %335 = vadd.xlane.f32.xlu0 %v158
    %v336 = vpop.xlane.xlu0 %335
    %337 = vadd.xlane.f32.xlu0 %v159
    %v338 = vpop.xlane.xlu0 %337
    %v339 = vadd.f32 %v333, %v336
    %v340 = vadd.f32 %v334, %v338
    %341 = vst.msk [vmem:[#allocation5] sm:$0xff] %vm330, %v339
    %342 = vst.msk [vmem:[#allocation5 + $0x8] sm:$0xff] %vm330, %v340
    %v343 = vld [vmem:[#allocation6] sm:$0x1]
    %v344 = vld [vmem:[#allocation6 + $0x1] sm:$0x1]
    %v345 = vadd.f32 %v88, %v89
    %v346 = vadd.f32 %v345, %v90
    %v347 = vadd.f32 %v346, %v91
    %v348 = vadd.f32 %v347, %v92
    %v349 = vadd.f32 %v348, %v93
    %v350 = vadd.f32 %v349, %v94
    %v351 = vadd.f32 %v350, %v95
    %v352 = vadd.f32 %v351, %v96
    %v353 = vadd.f32 %v352, %v97
    %v354 = vadd.f32 %v353, %v98
    %v355 = vadd.f32 %v354, %v99
    %v356 = vadd.f32 %v355, %v100
    %v357 = vadd.f32 %v356, %v101
    %v358 = vadd.f32 %v357, %v102
    %v359 = vadd.f32 %v358, %v103
    %v360 = vrot.slane %v359, 4
    %v361 = vadd.f32 %v359, %v360
    %v362 = vrot.slane %v361, 2
    %v363 = vadd.f32 %v361, %v362
    %v364 = vrot.slane %v363, 1
    %v365 = vadd.f32 %v363, %v364
    %v366 = vadd.f32 %v104, %v105
    %v367 = vadd.f32 %v366, %v106
    %v368 = vadd.f32 %v367, %v107
    %v369 = vadd.f32 %v368, %v108
    %v370 = vadd.f32 %v369, %v109
    %v371 = vadd.f32 %v370, %v110
    %v372 = vadd.f32 %v371, %v111
    %v373 = vadd.f32 %v372, %v112
    %v374 = vadd.f32 %v373, %v113
    %v375 = vadd.f32 %v374, %v114
    %v376 = vadd.f32 %v375, %v115
    %v377 = vadd.f32 %v376, %v116
    %v378 = vadd.f32 %v377, %v117
    %v379 = vadd.f32 %v378, %v118
    %v380 = vadd.f32 %v379, %v119
    %v381 = vrot.slane %v380, 4
    %v382 = vadd.f32 %v380, %v381
    %v383 = vrot.slane %v382, 2
    %v384 = vadd.f32 %v382, %v383
    %v385 = vrot.slane %v384, 1
    %v386 = vadd.f32 %v384, %v385
    %v387 = vadd.f32 %v343, %v365
    %v388 = vadd.f32 %v344, %v386
    %389 = vst [vmem:[#allocation6] sm:$0x1] %v387
    %390 = vst [vmem:[#allocation6 + $0x1] sm:$0x1] %v388
    // Predicated region
    $region38: #{hungarian_cost_matrix.1} parent=1 // pred_check
      %p391 = pneg %p39
    $region39: #{hungarian_cost_matrix.1} parent=1 // pred_check_branch
      %393 = sbr.rel (%p391) target = $region41
    $region40: #{hungarian_cost_matrix.1} parent=1 // pred_region
      %v394 = vld [vmem:[%s1] sm:$0xff]
      %v395 = vld [vmem:[%s1 + $0x8] sm:$0xff]
      %v396 = vld [vmem:[%s4] sm:$0xff]
      %v397 = vld [vmem:[%s4 + $0x8] sm:$0xff]
      %v398 = vld [vmem:[%s4 + $0x10] sm:$0x7]
      %v399 = vld [vmem:[%s4 + $0x18] sm:$0xff]
      %v400 = vld [vmem:[%s4 + $0x20] sm:$0xff]
      %v401 = vld [vmem:[%s4 + $0x28] sm:$0x7]
      %v402 = vld [vmem:[%s2] sm:$0xff]
      %v403 = vld [vmem:[%s2 + $0x8] sm:$0xff]
      %v404 = vld [vmem:[%s3] sm:$0x7]
      %v405 = vld [vmem:[%s3 + $0x4] sm:$0x7]
      %vm406 = vcmask 154624
      %v407 = vsel %vm406, %v394, -inf
      %408 = vmax.xlane.f32.xlu0 %v407
      %v409 = vpop.xlane.xlu0 %408
      %v410 = vsel %vm406, %v395, -inf
      %411 = vmax.xlane.f32.xlu0 %v410
      %v412 = vpop.xlane.xlu0 %411
      %v413 = vsub.f32 %v394, %v409
      %v414 = vsub.f32 %v395, %v412
      %v415 = vmul.f32 %v413, 1.442695
      %v416 = vpow.pop %v415
      %v417 = vmul.f32 %v414, 1.442695
      %v418 = vpow.pop %v417
      %v419 = vsel %vm406, %v416, 0.0
      %420 = vadd.xlane.f32.xlu0 %v419
      %v421 = vpop.xlane.xlu0 %420
      %v422 = vsel %vm406, %v418, 0.0
      %423 = vadd.xlane.f32.xlu0 %v422
      %v424 = vpop.xlane.xlu0 %423
      %v426 = vsel %vm406, %v416, 0
      %vm428 = vcmask 1042432
      %v430 = vsel %vm428, %v398, 0
      %432 = vmatprep.subr.mxu0 0.0
      %433 = vmatpush1.msra.mxu0 %v396
      %434 = vmatprep.subr.mxu0 0.0
      %435 = vmatpush1.msra.mxu0 %v397
      %436 = vmatprep.subr.mxu0 0.0
      %437 = vmatpush1.msra.mxu0 %v430
      %438 = vmatprep.subr.mxu0 0.0
      %439 = vmatpush1.msra.mxu0 0.0
      %440 = vmatprep.subr.mxu0 0.0
      %441 = vmatpush1.msra.mxu0 0.0
      %442 = vmatprep.subr.mxu0 0.0
      %443 = vmatpush1.msra.mxu0 0.0
      %444 = vmatprep.subr.mxu0 0.0
      %445 = vmatpush1.msra.mxu0 0.0
      %446 = vmatprep.subr.mxu0 0.0
      %447 = vmatpush1.msra.mxu0 0.0
      %448 = vmatprep.subr.mxu0 0.0
      %449 = vmatpush1.msra.mxu0 0.0
      %450 = vmatprep.subr.mxu0 0.0
      %451 = vmatpush1.msra.mxu0 0.0
      %452 = vmatprep.subr.mxu0 0.0
      %453 = vmatpush1.msra.mxu0 0.0
      %454 = vmatprep.subr.mxu0 0.0
      %455 = vmatpush1.msra.mxu0 0.0
      %456 = vmatprep.subr.mxu0 0.0
      %457 = vmatpush1.msra.mxu0 0.0
      %458 = vmatprep.subr.mxu0 0.0
      %459 = vmatpush1.msra.mxu0 0.0
      %460 = vmatprep.subr.mxu0 0.0
      %461 = vmatpush1.msra.mxu0 0.0
      %462 = vmatprep.subr.mxu0 0.0
      %463 = vmatpush1.msra.mxu0 0.0
      %464 = vmatprep.subr.mxu0 0.0
      %465 = vmatpush1.msra.mxu0 0.0
      %466 = vmatprep.subr.mxu0 0.0
      %467 = vmatpush1.msra.mxu0 0.0
      %468 = vmatprep.subr.mxu0 0.0
      %469 = vmatpush1.msra.mxu0 0.0
      %470 = vmatprep.subr.mxu0 0.0
      %471 = vmatpush1.msra.mxu0 0.0
      %472 = vmatprep.subr.mxu0 0.0
      %473 = vmatpush1.msra.mxu0 0.0
      %474 = vmatprep.subr.mxu0 0.0
      %475 = vmatpush1.msra.mxu0 0.0
      %476 = vmatprep.subr.mxu0 0.0
      %477 = vmatpush1.msra.mxu0 0.0
      %478 = vmatprep.subr.mxu0 0.0
      %479 = vmatpush1.msra.mxu0 0.0
      %480 = vmatprep.subr.mxu0 0.0
      %481 = vmatpush1.msra.mxu0 0.0
      %482 = vmatprep.subr.mxu0 0.0
      %483 = vmatpush1.msra.mxu0 0.0
      %484 = vmatprep.subr.mxu0 0.0
      %485 = vmatpush1.msra.mxu0 0.0
      %486 = vmatprep.subr.mxu0 0.0
      %487 = vmatpush1.msra.mxu0 0.0
      %488 = vmatprep.subr.mxu0 0.0
      %489 = vmatpush1.msra.mxu0 0.0
      %490 = vmatprep.subr.mxu0 0.0
      %491 = vmatpush1.msra.mxu0 0.0
      %492 = vmatprep.subr.mxu0 0.0
      %493 = vmatpush1.msra.mxu0 0.0
      %494 = vmatprep.subr.mxu0 0.0
      %495 = vmatpush1.msra.mxu0 0.0
      %496 = vmatprep.mubr.f32.mxu0 0.0
      %497 = vmatmul.mubr.f32.gmra.mrb[0].mxu0 %v426
      %v498 = vpop.f32.mrb[0].mxu0
      %v499 = vadd.f32 0.0, %v498
      %v500 = vpop.f32.mrb[0].mxu0
      %501 = vdwg.mxu0
      %v503 = vsel %vm406, %v418, 0
      %v506 = vsel %vm428, %v401, 0
      %508 = vmatprep.subr.mxu0 0.0
      %509 = vmatpush1.msra.mxu0 %v399
      %510 = vmatprep.subr.mxu0 0.0
      %511 = vmatpush1.msra.mxu0 %v400
      %512 = vmatprep.subr.mxu0 0.0
      %513 = vmatpush1.msra.mxu0 %v506
      %514 = vmatprep.subr.mxu0 0.0
      %515 = vmatpush1.msra.mxu0 0.0
      %516 = vmatprep.subr.mxu0 0.0
      %517 = vmatpush1.msra.mxu0 0.0
      %518 = vmatprep.subr.mxu0 0.0
      %519 = vmatpush1.msra.mxu0 0.0
      %520 = vmatprep.subr.mxu0 0.0
      %521 = vmatpush1.msra.mxu0 0.0
      %522 = vmatprep.subr.mxu0 0.0
      %523 = vmatpush1.msra.mxu0 0.0
      %524 = vmatprep.subr.mxu0 0.0
      %525 = vmatpush1.msra.mxu0 0.0
      %526 = vmatprep.subr.mxu0 0.0
      %527 = vmatpush1.msra.mxu0 0.0
      %528 = vmatprep.subr.mxu0 0.0
      %529 = vmatpush1.msra.mxu0 0.0
      %530 = vmatprep.subr.mxu0 0.0
      %531 = vmatpush1.msra.mxu0 0.0
      %532 = vmatprep.subr.mxu0 0.0
      %533 = vmatpush1.msra.mxu0 0.0
      %534 = vmatprep.subr.mxu0 0.0
      %535 = vmatpush1.msra.mxu0 0.0
      %536 = vmatprep.subr.mxu0 0.0
      %537 = vmatpush1.msra.mxu0 0.0
      %538 = vmatprep.subr.mxu0 0.0
      %539 = vmatpush1.msra.mxu0 0.0
      %540 = vmatprep.subr.mxu0 0.0
      %541 = vmatpush1.msra.mxu0 0.0
      %542 = vmatprep.subr.mxu0 0.0
      %543 = vmatpush1.msra.mxu0 0.0
      %544 = vmatprep.subr.mxu0 0.0
      %545 = vmatpush1.msra.mxu0 0.0
      %546 = vmatprep.subr.mxu0 0.0
      %547 = vmatpush1.msra.mxu0 0.0
      %548 = vmatprep.subr.mxu0 0.0
      %549 = vmatpush1.msra.mxu0 0.0
      %550 = vmatprep.subr.mxu0 0.0
      %551 = vmatpush1.msra.mxu0 0.0
      %552 = vmatprep.subr.mxu0 0.0
      %553 = vmatpush1.msra.mxu0 0.0
      %554 = vmatprep.subr.mxu0 0.0
      %555 = vmatpush1.msra.mxu0 0.0
      %556 = vmatprep.subr.mxu0 0.0
      %557 = vmatpush1.msra.mxu0 0.0
      %558 = vmatprep.subr.mxu0 0.0
      %559 = vmatpush1.msra.mxu0 0.0
      %560 = vmatprep.subr.mxu0 0.0
      %561 = vmatpush1.msra.mxu0 0.0
      %562 = vmatprep.subr.mxu0 0.0
      %563 = vmatpush1.msra.mxu0 0.0
      %564 = vmatprep.subr.mxu0 0.0
      %565 = vmatpush1.msra.mxu0 0.0
      %566 = vmatprep.subr.mxu0 0.0
      %567 = vmatpush1.msra.mxu0 0.0
      %568 = vmatprep.subr.mxu0 0.0
      %569 = vmatpush1.msra.mxu0 0.0
      %570 = vmatprep.subr.mxu0 0.0
      %571 = vmatpush1.msra.mxu0 0.0
      %572 = vmatprep.mubr.f32.mxu0 0.0
      %573 = vmatmul.mubr.f32.gmra.mrb[0].mxu0 %v503
      %v574 = vpop.f32.mrb[0].mxu0
      %v575 = vadd.f32 0.0, %v574
      %v576 = vpop.f32.mrb[0].mxu0
      %577 = vdwg.mxu0
      %v578 = vsub.f32 0.0, %v499
      %v579 = vsub.f32 0.0, %v575
      %v580 = vrcp.pop %v421
      %v581 = vrcp.pop %v424
      %v582 = vmul.f32 %v578, %v580
      %v583 = vmul.f32 %v579, %v581
      %v584 = vld [vmem:[#allocation4] sm:$0xff]
      %v585 = vld [vmem:[#allocation4 + $0x8] sm:$0xff]
      %v586 = vld [vmem:[#allocation2] sm:$0xff]
      %v587 = vld [vmem:[#allocation2 + $0x8] sm:$0xff]
      %589 = vset.pattern.permute.xlu0 0
      %590 = vperm.xlu0 %589, %v584
      %v591 = vpop.permute.xlu0 %590
      %594 = vset.pattern.permute.xlu0 0
      %595 = vperm.xlu0 %594, %v585
      %v596 = vpop.permute.xlu0 %595
      %v598 = vsub.f32 %v591, %v586
      %v599 = vsub.f32 %v596, %v587
      %v600 = vmul.f32 %v598, 0.0078125
      %v601 = vmul.f32 %v599, 0.0078125
      %v602 = vld [vmem:[#allocation5] sm:$0xff]
      %v603 = vld [vmem:[#allocation5 + $0x8] sm:$0xff]
      %v604 = vld [vmem:[#allocation6] sm:$0x1]
      %v605 = vld [vmem:[#allocation6 + $0x1] sm:$0x1]
      %607 = vset.pattern.permute.xlu0 0
      %608 = vperm.xlu0 %607, %v602
      %v609 = vpop.permute.xlu0 %608
      %612 = vset.pattern.permute.xlu0 0
      %613 = vperm.xlu0 %612, %v603
      %v614 = vpop.permute.xlu0 %613
      %v618 = vlaneseq
      %v619 = vshrl.u32 %v618, 7
      %v620 = vsub.s32 0, %v619
      %v621 = vrot.slane %v604, %v620
      %v622 = vlaneseq
      %v623 = vshrl.u32 %v622, 7
      %v624 = vsub.s32 0, %v623
      %v625 = vrot.slane %v605, %v624
      %v628 = vadd.f32 %v609, %v621
      %v629 = vadd.f32 %v614, %v625
      %v630 = vadd.f32 %v628, 1.0
      %v631 = vadd.f32 %v629, 1.0
      %v632 = vld [vmem:[#allocation3] sm:$0xff]
      %v633 = vld [vmem:[#allocation3 + $0x8] sm:$0xff]
      %v634 = vmul.f32 %v632, 2.0
      %v635 = vmul.f32 %v633, 2.0
      %v636 = vadd.f32 %v634, 1.0
      %v637 = vadd.f32 %v635, 1.0
      %v638 = vrcp.pop %v630
      %v639 = vrcp.pop %v631
      %v640 = vmul.f32 %v636, %v638
      %v641 = vmul.f32 %v637, %v639
      %v642 = vsub.f32 1.0, %v640
      %v643 = vsub.f32 1.0, %v641
      %645 = vset.pattern.permute.xlu0 0
      %646 = vperm.xlu0 %645, %v402
      %v647 = vpop.permute.xlu0 %646
      %650 = vset.pattern.permute.xlu0 0
      %651 = vperm.xlu0 %650, %v403
      %v652 = vpop.permute.xlu0 %651
      %v654 = vlaneseq
      %v655 = vshrl.u32 %v654, 7
      %v656 = vsub.s32 0, %v655
      %v657 = vrot.slane %v404, %v656
      %v658 = vlaneseq
      %v659 = vshrl.u32 %v658, 7
      %v660 = vsub.s32 0, %v659
      %v661 = vrot.slane %v405, %v660
      %v662 = vsub.f32 %v647, %v657
      %v663 = vsub.f32 %v652, %v661
      %v664 = vand.u32 2147483647, %v662
      %v665 = vand.u32 2147483647, %v663
      %666 = vset.pattern.permute.xlu0 1
      %667 = vperm.xlu0 %666, %v402
      %v668 = vpop.permute.xlu0 %667
      %670 = vset.pattern.permute.xlu0 1
      %671 = vperm.xlu0 %670, %v403
      %v672 = vpop.permute.xlu0 %671
      %v674 = vlaneseq
      %v675 = vshrl.u32 %v674, 7
      %v676 = vsub.s32 1, %v675
      %v677 = vrot.slane %v404, %v676
      %v678 = vlaneseq
      %v679 = vshrl.u32 %v678, 7
      %v680 = vsub.s32 1, %v679
      %v681 = vrot.slane %v405, %v680
      %v682 = vsub.f32 %v668, %v677
      %v683 = vsub.f32 %v672, %v681
      %v684 = vand.u32 2147483647, %v682
      %v685 = vand.u32 2147483647, %v683
      %v686 = vadd.f32 %v664, %v684
      %v687 = vadd.f32 %v665, %v685
      %688 = vset.pattern.permute.xlu0 2
      %689 = vperm.xlu0 %688, %v402
      %v690 = vpop.permute.xlu0 %689
      %692 = vset.pattern.permute.xlu0 2
      %693 = vperm.xlu0 %692, %v403
      %v694 = vpop.permute.xlu0 %693
      %v696 = vlaneseq
      %v697 = vshrl.u32 %v696, 7
      %v698 = vsub.s32 2, %v697
      %v699 = vrot.slane %v404, %v698
      %v700 = vlaneseq
      %v701 = vshrl.u32 %v700, 7
      %v702 = vsub.s32 2, %v701
      %v703 = vrot.slane %v405, %v702
      %v704 = vsub.f32 %v690, %v699
      %v705 = vsub.f32 %v694, %v703
      %v706 = vand.u32 2147483647, %v704
      %v707 = vand.u32 2147483647, %v705
      %v708 = vadd.f32 %v686, %v706
      %v709 = vadd.f32 %v687, %v707
      %s710 = sld [smem:[#allocation7]]
      %v711 = vstv %s710
      %v712 = vmul.f32 %v711, %v582
      %v713 = vmul.f32 %v711, %v583
      %s714 = sld [smem:[#allocation7 + $0x1]]
      %v715 = vstv %s714
      %v716 = vmul.f32 %v715, %v600
      %v717 = vmul.f32 %v715, %v601
      %v718 = vadd.f32 %v712, %v716
      %v719 = vadd.f32 %v713, %v717
      %s720 = sld [smem:[#allocation7 + $0x2]]
      %v721 = vstv %s720
      %v722 = vmul.f32 %v721, %v642
      %v723 = vmul.f32 %v721, %v643
      %v724 = vadd.f32 %v718, %v722
      %v725 = vadd.f32 %v719, %v723
      %s726 = sld [smem:[#allocation7 + $0x3]]
      %v727 = vstv %s726
      %v728 = vmul.f32 %v727, %v708
      %v729 = vmul.f32 %v727, %v709
      %v730 = vadd.f32 %v724, %v728
      %v731 = vadd.f32 %v725, %v729
      %vm732 = vcmp.ne.f32.partialorder %v730, %v730
      %vm733 = vcmp.ne.f32.partialorder %v731, %v731
      %v734 = vsel %vm732, 0.0, %v730
      %v735 = vsel %vm733, 0.0, %v731
      %vm736 = vcmp.eq.f32.partialorder %v734, inf
      %vm737 = vcmp.eq.f32.partialorder %v735, inf
      %v738 = vsel %vm736, 3.4028235e+38, %v734
      %v739 = vsel %vm737, 3.4028235e+38, %v735
      %vm740 = vcmp.eq.f32.partialorder %v738, -inf
      %vm741 = vcmp.eq.f32.partialorder %v739, -inf
      %v742 = vsel %vm740, -3.4028235e+38, %v738
      %v743 = vsel %vm741, -3.4028235e+38, %v739
      %744 = vst [vmem:[%s7] sm:$0xff] %v742
      %745 = vst [vmem:[%s7 + $0x8] sm:$0xff] %v743
    $region41: #{hungarian_cost_matrix.1} parent=1 // pred_fallthru
      _
    // Predicated region
    $region42: #{hungarian_cost_matrix.1} parent=1 // pred_check
      _
    $region43: #{hungarian_cost_matrix.1} parent=1 // pred_check_branch
      %747 = sbr.rel (0) target = $region45
    $region44: #{hungarian_cost_matrix.1} parent=1 // pred_region
      _
    $region45: #{hungarian_cost_matrix.1} parent=1 // pred_fallthru
      _
    // Predicated region
    $region46: #{hungarian_cost_matrix.1} parent=1 // pred_check
      _
    $region47: #{hungarian_cost_matrix.1} parent=1 // pred_check_branch
      %749 = sbr.rel (0) target = $region49
    $region48: #{hungarian_cost_matrix.1} parent=1 // pred_region
      _
    $region49: #{hungarian_cost_matrix.1} parent=1 // pred_fallthru
      _
    %750 = vsyncpa [#allocation8], 1

</llo_original>
